<compile_context>
chip_gen: v6e
topology: v6e:2x2x1
jax: 0.10.0
libtpu: 0.0.40
codegen_flags: <defaults>
</compile_context>

<pallas_src>
import math
import functools

import jax
import jax.numpy as jnp
from jax.experimental import pallas as pl
from jax.experimental.pallas import tpu as pltpu


def _round_up(a: int, b: int) -> int:
    return (a + b - 1) // b * b


def _mem_kernel(x_ref, w_ref, out_ref, att_ref, *, shrink_thres, mem_dim):
    # x_ref: [TM, Fp] bf16 row tile, w_ref: [Mp, Fp] bf16 full (padded) memory.
    x = x_ref[...]
    w = w_ref[...]

    # logits = x @ W^T -> [TM, Mp], bf16 inputs, f32 accumulation on the MXU.
    logits = jax.lax.dot_general(
        x, w,
        dimension_numbers=(((1,), (1,)), ((), ())),
        preferred_element_type=jnp.float32,
    )

    # Mask padded memory slots so the softmax matches the unpadded computation.
    if logits.shape[1] != mem_dim:
        col = jax.lax.broadcasted_iota(jnp.int32, logits.shape, 1)
        logits = jnp.where(col < mem_dim, logits, jnp.float32(-1e30))

    # Softmax over the memory dimension (f32).
    logits = logits - jnp.max(logits, axis=1, keepdims=True)
    e = jnp.exp(logits)
    att = e * pl.reciprocal(jnp.sum(e, axis=1, keepdims=True), approx=True)

    if shrink_thres > 0:
        lam = jnp.float32(shrink_thres)
        eps = jnp.float32(1e-12)
        # hard_shrink_relu: relu(a - l) * a / (|a - l| + eps)
        shifted = att - lam
        att = (jnp.maximum(shifted, 0.0) * att
               * pl.reciprocal(jnp.abs(shifted) + eps, approx=True))
        # L1 normalize along the memory dimension.
        denom = jnp.maximum(jnp.sum(jnp.abs(att), axis=1, keepdims=True), eps)
        att = att * pl.reciprocal(denom, approx=True)

    # out = att @ W -> [TM, Fp]; att fed to the MXU in bf16, f32 accumulation.
    out = jnp.dot(att.astype(w.dtype), w, preferred_element_type=jnp.float32)

    out_ref[...] = out.astype(out_ref.dtype)
    att_ref[...] = att.astype(att_ref.dtype)


def mem_module_forward(x, weight, shrink_thres=0.0025, *, block_rows=256):
    """x: [N, fea_dim], weight: [mem_dim, fea_dim]. Returns {'output', 'att'}."""
    n, fea_dim = x.shape
    mem_dim, fea_dim_w = weight.shape
    assert fea_dim == fea_dim_w

    out_dtype = x.dtype

    # Lane-dense (multiple-of-128) padded feature / memory dims.
    fea_pad = _round_up(fea_dim, 128)
    mem_pad = _round_up(mem_dim, 128)

    # Size the row tile to a VMEM budget that is safe on v5e/v6e (128 MiB) and
    # v7x (64 MiB).  Rough per-row cost: x bf16 (2-deep), out/att f32 (2-deep),
    # plus f32 [TM, Mp] intermediates.
    vmem_budget = 48 * 1024 * 1024
    w_bytes = 2 * mem_pad * fea_pad * 2          # bf16 W, double-buffered
    per_row = (2 * 2 * fea_pad                   # x bf16 x2
               + 2 * 4 * fea_pad                 # out f32 x2
               + 2 * 4 * mem_pad                 # att f32 x2
               + 4 * 4 * mem_pad)                # f32 intermediates
    cap = max(8, ((vmem_budget - w_bytes - (4 << 20)) // max(per_row, 1)) // 8 * 8)

    block_rows = _round_up(max(8, int(block_rows)), 8)
    block_rows = int(min(block_rows, cap, _round_up(n, 8)))
    n_pad = _round_up(n, block_rows)

    # Pad + cast matmul operands to bf16 (halves HBM traffic, bf16-native MXU).
    x_p = jnp.pad(x.astype(jnp.bfloat16),
                  ((0, n_pad - n), (0, fea_pad - fea_dim)))
    w_p = jnp.pad(weight.astype(jnp.bfloat16),
                  ((0, mem_pad - mem_dim), (0, fea_pad - fea_dim)))

    kernel = functools.partial(_mem_kernel, shrink_thres=float(shrink_thres),
                               mem_dim=mem_dim)

    cost = pl.CostEstimate(
        flops=int(4 * n_pad * mem_pad * fea_pad),          # two matmuls
        transcendentals=int(n_pad * mem_pad),              # exp
        bytes_accessed=int(x_p.size * 2 + w_p.size * 2
                           + n_pad * fea_pad * 4 + n_pad * mem_pad * 4),
    )

    # TODO(synk): single-buffer the constant W block (pipeline_mode=pl.Buffered(1))
    # once that is reliable for top-level BlockSpecs; the default double buffer
    # costs one extra copy of W in VMEM.
    out_pad, att_pad = pl.pallas_call(
        kernel,
        out_shape=(
            jax.ShapeDtypeStruct((n_pad, fea_pad), jnp.float32),
            jax.ShapeDtypeStruct((n_pad, mem_pad), jnp.float32),
        ),
        grid_spec=pltpu.PrefetchScalarGridSpec(
            num_scalar_prefetch=0,
            grid=(n_pad // block_rows,),
            in_specs=[
                pl.BlockSpec((block_rows, fea_pad), lambda i: (i, 0)),
                pl.BlockSpec((mem_pad, fea_pad), lambda i: (0, 0)),
            ],
            out_specs=[
                pl.BlockSpec((block_rows, fea_pad), lambda i: (i, 0)),
                pl.BlockSpec((block_rows, mem_pad), lambda i: (i, 0)),
            ],
        ),
        compiler_params=pltpu.CompilerParams(
            dimension_semantics=("parallel",),
            vmem_limit_bytes=vmem_budget,
        ),
        cost_estimate=cost,
    )(x_p, w_p)

    out = out_pad[:n, :fea_dim].astype(out_dtype)
    att = att_pad[:n, :mem_dim].astype(out_dtype)
    return {"output": out, "att": att}


def _reference_forward(x, weight, shrink_thres=0.0025):
    """Pure-JAX f32 reference mirroring the PyTorch MemoryUnit.forward."""
    logits = x @ weight.T
    att = jax.nn.softmax(logits, axis=1)
    if shrink_thres > 0:
        lam, eps = shrink_thres, 1e-12
        shifted = att - lam
        att = jnp.maximum(shifted, 0.0) * att / (jnp.abs(shifted) + eps)
        att = att / jnp.maximum(jnp.sum(jnp.abs(att), axis=1, keepdims=True), eps)
    out = att @ weight
    return {"output": out, "att": att}


if __name__ == "__main__":
    # Small shapes: N=16 feature vectors, fea_dim=32, mem_dim=64
    N, FEA_DIM, MEM_DIM = 16, 32, 64
    SHRINK = 0.0025

    key = jax.random.PRNGKey(0)
    kx, kw = jax.random.split(key)

    # Deterministic init matching reset_parameters(): U(-stdv, stdv), stdv=1/sqrt(fea_dim)
    stdv = 1.0 / math.sqrt(FEA_DIM)
    weight = jax.random.uniform(
        kw, (MEM_DIM, FEA_DIM), dtype=jnp.float32, minval=-stdv, maxval=stdv
    )
    x = jax.random.normal(kx, (N, FEA_DIM), dtype=jnp.float32)

    res = mem_module_forward(x, weight, SHRINK)
    res = jax.tree_util.tree_map(jax.block_until_ready, res)

    ref = _reference_forward(x, weight, SHRINK)
    # bf16 MXU operands + approx reciprocals => relaxed tolerance vs f32 reference.
    assert res["output"].shape == (N, FEA_DIM)
    assert res["att"].shape == (N, MEM_DIM)
    assert jnp.allclose(res["output"], ref["output"], atol=1e-2, rtol=1e-2)
    assert jnp.allclose(res["att"], ref["att"], atol=1e-2, rtol=1e-2)

    print("KERNEL_OK")
</pallas_src>

<mosaic_0001>
module attributes {stable_mosaic.version = 11 : i64} {
  func.func @_mem_kernel(%arg0: i32, %arg1: memref<16x128xbf16, #tpu.memory_space<vmem>>, %arg2: memref<128x128xbf16, #tpu.memory_space<vmem>>, %arg3: memref<16x128xf32, #tpu.memory_space<vmem>>, %arg4: memref<16x128xf32, #tpu.memory_space<vmem>>) attributes {dimension_semantics = [#tpu.dimension_semantics<parallel>], iteration_bounds = array<i64: 1>, scalar_prefetch = 0 : i64, scratch_operands = 0 : i64, tpu.core_type = #tpu.core_type<tc>, window_params = [{transform_indices = @transform_0, window_bounds = array<i64: 16, 128>}, {pipeline_mode = #tpu.pipeline_mode<synchronous>, transform_indices = @transform_1, window_bounds = array<i64: 128, 128>}, {transform_indices = @transform_2, window_bounds = array<i64: 16, 128>}, {transform_indices = @transform_3, window_bounds = array<i64: 16, 128>}]} {
    %c0 = arith.constant 0 : index
    %c0_0 = arith.constant 0 : index
    %0 = vector.load %arg1[%c0, %c0_0] : memref<16x128xbf16, #tpu.memory_space<vmem>>, vector<16x128xbf16>
    %c0_1 = arith.constant 0 : index
    %c0_2 = arith.constant 0 : index
    %1 = vector.load %arg2[%c0_1, %c0_2] : memref<128x128xbf16, #tpu.memory_space<vmem>>, vector<128x128xbf16>
    %cst = arith.constant dense<0.000000e+00> : vector<16x128xf32>
    %2 = tpu.matmul %0, %1, %cst {dimension_numbers = #tpu.dot_dimension_numbers<[1], [1], [0], [0], [0, 0, 1, 0], [], []>} : vector<16x128xbf16>, vector<128x128xbf16>, vector<16x128xf32> -> vector<16x128xf32>
    %3 = tpu.iota {dimensions = array<i32: 1>} : vector<16x128xi32>
    %c64_i32 = arith.constant 64 : i32
    %4 = vector.broadcast %c64_i32 : i32 to vector<16x128xi32>
    %5 = arith.cmpi slt, %3, %4 : vector<16x128xi32>
    %cst_3 = arith.constant -1.000000e+30 : f32
    %6 = vector.broadcast %cst_3 : f32 to vector<16x128xf32>
    %7 = arith.select %5, %2, %6 : vector<16x128xi1>, vector<16x128xf32>
    %cst_4 = arith.constant dense<0xFF800000> : vector<16xf32>
    %8 = vector.multi_reduction <maximumf>, %7, %cst_4 [1] : vector<16x128xf32> to vector<16xf32>
    %9 = vector.shape_cast %8 : vector<16xf32> to vector<16x1xf32>
    %10 = vector.broadcast %9 : vector<16x1xf32> to vector<16x128xf32>
    %11 = arith.subf %7, %10 : vector<16x128xf32>
    %12 = math.exp %11 : vector<16x128xf32>
    %cst_5 = arith.constant dense<0.000000e+00> : vector<16xf32>
    %13 = vector.multi_reduction <add>, %12, %cst_5 [1] : vector<16x128xf32> to vector<16xf32>
    %14 = vector.shape_cast %13 : vector<16xf32> to vector<16x1xf32>
    %15 = tpu.reciprocal %14 {approx = true} : vector<16x1xf32> -> vector<16x1xf32>
    %16 = vector.broadcast %15 : vector<16x1xf32> to vector<16x128xf32>
    %17 = arith.mulf %12, %16 : vector<16x128xf32>
    %cst_6 = arith.constant 2.500000e-03 : f32
    %18 = vector.broadcast %cst_6 : f32 to vector<16x128xf32>
    %19 = arith.subf %17, %18 : vector<16x128xf32>
    %cst_7 = arith.constant 0.000000e+00 : f32
    %20 = vector.broadcast %cst_7 : f32 to vector<16x128xf32>
    %21 = arith.maximumf %19, %20 : vector<16x128xf32>
    %22 = arith.mulf %21, %17 : vector<16x128xf32>
    %23 = math.absf %19 : vector<16x128xf32>
    %cst_8 = arith.constant 9.99999996E-13 : f32
    %24 = vector.broadcast %cst_8 : f32 to vector<16x128xf32>
    %25 = arith.addf %23, %24 : vector<16x128xf32>
    %26 = tpu.reciprocal %25 {approx = true} : vector<16x128xf32> -> vector<16x128xf32>
    %27 = arith.mulf %22, %26 : vector<16x128xf32>
    %28 = math.absf %27 : vector<16x128xf32>
    %cst_9 = arith.constant dense<0.000000e+00> : vector<16xf32>
    %29 = vector.multi_reduction <add>, %28, %cst_9 [1] : vector<16x128xf32> to vector<16xf32>
    %30 = vector.shape_cast %29 : vector<16xf32> to vector<16x1xf32>
    %cst_10 = arith.constant 9.99999996E-13 : f32
    %31 = vector.broadcast %cst_10 : f32 to vector<16x1xf32>
    %32 = arith.maximumf %30, %31 : vector<16x1xf32>
    %33 = tpu.reciprocal %32 {approx = true} : vector<16x1xf32> -> vector<16x1xf32>
    %34 = vector.broadcast %33 : vector<16x1xf32> to vector<16x128xf32>
    %35 = arith.mulf %27, %34 : vector<16x128xf32>
    %36 = arith.truncf %35 : vector<16x128xf32> to vector<16x128xbf16>
    %cst_11 = arith.constant dense<0.000000e+00> : vector<16x128xf32>
    %37 = tpu.matmul %36, %1, %cst_11 {dimension_numbers = #tpu.dot_dimension_numbers<[1], [0], [0], [1], [0, 0, 1, 1], [], []>} : vector<16x128xbf16>, vector<128x128xbf16>, vector<16x128xf32> -> vector<16x128xf32>
    %c0_12 = arith.constant 0 : index
    %c0_13 = arith.constant 0 : index
    %38 = vector.load %arg3[%c0_12, %c0_13] : memref<16x128xf32, #tpu.memory_space<vmem>>, vector<16x128xf32>
    tpu.vector_store %arg3[%c0_12, %c0_13], %37 {strides = array<i32>} : memref<16x128xf32, #tpu.memory_space<vmem>>, vector<16x128xf32>,
    %c0_14 = arith.constant 0 : index
    %c0_15 = arith.constant 0 : index
    %39 = vector.load %arg4[%c0_14, %c0_15] : memref<16x128xf32, #tpu.memory_space<vmem>>, vector<16x128xf32>
    tpu.vector_store %arg4[%c0_14, %c0_15], %35 {strides = array<i32>} : memref<16x128xf32, #tpu.memory_space<vmem>>, vector<16x128xf32>,
    return
  }
  func.func @transform_0(%arg0: i32) -> (i32, i32) {
    %c0_i32 = arith.constant 0 : i32
    %c0_i32_0 = arith.constant 0 : i32
    return %arg0, %c0_i32 : i32, i32
  }
  func.func @transform_1(%arg0: i32) -> (i32, i32) {
    %c0_i32 = arith.constant 0 : i32
    %c0_i32_0 = arith.constant 0 : i32
    %c0_i32_1 = arith.constant 0 : i32
    return %c0_i32, %c0_i32_0 : i32, i32
  }
  func.func @transform_2(%arg0: i32) -> (i32, i32) {
    %c0_i32 = arith.constant 0 : i32
    %c0_i32_0 = arith.constant 0 : i32
    return %arg0, %c0_i32 : i32, i32
  }
  func.func @transform_3(%arg0: i32) -> (i32, i32) {
    %c0_i32 = arith.constant 0 : i32
    %c0_i32_0 = arith.constant 0 : i32
    return %arg0, %c0_i32 : i32, i32
  }
}

</mosaic_0001>

<llo_original>
// kernel: tpu_custom_call.1
$region0: #{tpu_custom_call.1}
  #allocation0 [shape = 'u32[]', space=smem, size = 0x4, offset = 0x4, fixed_abs, tag = 'smem constant byte address 0x4 - core index']
  #allocation1 [shape = 'u32[144,128]{1,0:T(1,128)}', space=vmem, size = 0x12000, scoped, tag = 'internal scratch']
  %s0 = inlined_call_operand.hbm [shape: bf16[16,128], index: 0, kind: input, shape index: {}]
  %s1 = inlined_call_operand.hbm [shape: bf16[128,128], index: 1, kind: input, shape index: {}]
  %s2 = inlined_call_operand.hbm [shape: f32[16,128], index: 2, kind: output, shape index: {0}]
  %s3 = inlined_call_operand.hbm [shape: f32[16,128], index: 3, kind: output, shape index: {1}]
  %4 = xla_tuple %s2, %s3
  %s5 = sld [smem:[#allocation0]]
  $region34: #{tpu_custom_call.1} parent=0
    _
  %s7 = ssub.s32 1, %s5
  %s8 = scalar_select 0, %s7, %s5
  $region1: #{tpu_custom_call.1} parent=0
    #allocation2 [shape = 'u8[4096]{0}', space=vmem, size = 0x1000, scoped, tag = 'input window, operand 0, single buffered']
    #allocation3 [shape = 's32[1]{0}', space=sflag, size = 0x4, scoped, tag = 'scoped memory for tpu_custom_call.1']
    #allocation4 [shape = 's32[1]{0}', space=sflag, size = 0x4, scoped, tag = 'scoped memory for tpu_custom_call.1']
    #allocation5 [shape = 'u8[32768]{0}', space=vmem, size = 0x8000, scoped, tag = 'input window, operand 1, single buffered']
    #allocation6 [shape = 's32[1]{0}', space=sflag, size = 0x4, scoped, tag = 'scoped memory for tpu_custom_call.1']
    #allocation7 [shape = 'u8[8192]{0}', space=vmem, size = 0x2000, scoped, tag = 'output window, operand 0, single buffered']
    #allocation8 [shape = 'u8[8192]{0}', space=vmem, size = 0x2000, scoped, tag = 'output window, operand 1, single buffered']
    #allocation9 [shape = 's32[1]{0}', space=sflag, size = 0x4, scoped, tag = 'scoped memory for tpu_custom_call.1']
    %9 = vsyncpa [#allocation3], 0
    %10 = vsyncpa [#allocation6], 0
    %11 = vsyncpa [#allocation4], 0
    %12 = vsyncpa [#allocation9], 0
    // Predicated region
    $region2: #{tpu_custom_call.1} parent=1 // pred_check
      _
    $region3: #{tpu_custom_call.1} parent=1 // pred_check_branch
      %14 = sbr.rel (0) target = $region5
    $region4: #{tpu_custom_call.1} parent=1 // pred_region
      %s16 = ssub.s32 128, 128
      %17 = vsyncadd [#allocation3], %s16
      %s18 = sshll.u32 [#allocation2], 4
      %s19 = int_to_ptr.vmem [resolvable:$true] %s18
      %24 = dma.hbm_to_vmem [thread:$0]  %s0, 128, %s19, [#allocation3], 64, 64, 4
    $region5: #{tpu_custom_call.1} parent=1 // pred_fallthru
      _
    // Predicated region
    $region6: #{tpu_custom_call.1} parent=1 // pred_check
      _
    $region7: #{tpu_custom_call.1} parent=1 // pred_check_branch
      %26 = sbr.rel (0) target = $region9
    $region8: #{tpu_custom_call.1} parent=1 // pred_region
      %s28 = ssub.s32 1024, 1024
      %29 = vsyncadd [#allocation6], %s28
      %s30 = sshll.u32 [#allocation5], 4
      %s31 = int_to_ptr.vmem [resolvable:$true] %s30
      %36 = dma.hbm_to_vmem [thread:$0]  %s1, 1024, %s31, [#allocation6], 64, 64, 4
    $region9: #{tpu_custom_call.1} parent=1 // pred_fallthru
      _
    // Predicated region
    $region10: #{tpu_custom_call.1} parent=1 // pred_check
      _
    $region11: #{tpu_custom_call.1} parent=1 // pred_check_branch
      %38 = sbr.rel (0) target = $region13
    $region12: #{tpu_custom_call.1} parent=1 // pred_region
      %39 = dma.done [#allocation3], 128
    $region13: #{tpu_custom_call.1} parent=1 // pred_fallthru
      _
    // Predicated region
    $region14: #{tpu_custom_call.1} parent=1 // pred_check
      _
    $region15: #{tpu_custom_call.1} parent=1 // pred_check_branch
      %41 = sbr.rel (0) target = $region17
    $region16: #{tpu_custom_call.1} parent=1 // pred_region
      %42 = dma.done [#allocation6], 1024
    $region17: #{tpu_custom_call.1} parent=1 // pred_fallthru
      _
    %v44 = vld [vmem:[#allocation2] sm:$0xf]
    %v45 = vld [vmem:[#allocation2 + $0x4] sm:$0xf]
    %v46 = vld [vmem:[#allocation5] sm:$0xf]
    %v47 = vld [vmem:[#allocation5 + $0x4] sm:$0xf]
    %v48 = vld [vmem:[#allocation5 + $0x8] sm:$0xf]
    %v49 = vld [vmem:[#allocation5 + $0xc] sm:$0xf]
    %v50 = vld [vmem:[#allocation5 + $0x10] sm:$0xf]
    %v51 = vld [vmem:[#allocation5 + $0x14] sm:$0xf]
    %v52 = vld [vmem:[#allocation5 + $0x18] sm:$0xf]
    %v53 = vld [vmem:[#allocation5 + $0x1c] sm:$0xf]
    %v54 = vld [vmem:[#allocation5 + $0x20] sm:$0xf]
    %v55 = vld [vmem:[#allocation5 + $0x24] sm:$0xf]
    %v56 = vld [vmem:[#allocation5 + $0x28] sm:$0xf]
    %v57 = vld [vmem:[#allocation5 + $0x2c] sm:$0xf]
    %v58 = vld [vmem:[#allocation5 + $0x30] sm:$0xf]
    %v59 = vld [vmem:[#allocation5 + $0x34] sm:$0xf]
    %v60 = vld [vmem:[#allocation5 + $0x38] sm:$0xf]
    %v61 = vld [vmem:[#allocation5 + $0x3c] sm:$0xf]
    %v64 = vunpack.c.l.b16 %v44
    %v65 = vunpack.c.l.b16 %v45
    %v66 = vpack.c.b16 %v65, %v64
    %v84 = vunpack.c.l.b16 %v46
    %v85 = vunpack.c.l.b16 %v47
    %v86 = vunpack.c.l.b16 %v48
    %v87 = vunpack.c.l.b16 %v49
    %v88 = vunpack.c.l.b16 %v50
    %v89 = vunpack.c.l.b16 %v51
    %v90 = vunpack.c.l.b16 %v52
    %v91 = vunpack.c.l.b16 %v53
    %v92 = vunpack.c.l.b16 %v54
    %v93 = vunpack.c.l.b16 %v55
    %v94 = vunpack.c.l.b16 %v56
    %v95 = vunpack.c.l.b16 %v57
    %v96 = vunpack.c.l.b16 %v58
    %v97 = vunpack.c.l.b16 %v59
    %v98 = vunpack.c.l.b16 %v60
    %v99 = vunpack.c.l.b16 %v61
    %v100 = vpack.c.b16 %v85, %v84
    %v101 = vpack.c.b16 %v87, %v86
    %v102 = vpack.c.b16 %v89, %v88
    %v103 = vpack.c.b16 %v91, %v90
    %v104 = vpack.c.b16 %v93, %v92
    %v105 = vpack.c.b16 %v95, %v94
    %v106 = vpack.c.b16 %v97, %v96
    %v107 = vpack.c.b16 %v99, %v98
    %116 = vmatprep.subr.bf16.mxu0 0
    %117 = vmatpush1.bf16.xpose.msra.mxu0 %v107
    %118 = vmatprep.subr.bf16.mxu0 0
    %119 = vmatpush1.bf16.xpose.msra.mxu0 %v106
    %120 = vmatprep.subr.bf16.mxu0 0
    %121 = vmatpush1.bf16.xpose.msra.mxu0 %v105
    %122 = vmatprep.subr.bf16.mxu0 0
    %123 = vmatpush1.bf16.xpose.msra.mxu0 %v104
    %124 = vmatprep.subr.bf16.mxu0 0
    %125 = vmatpush1.bf16.xpose.msra.mxu0 %v103
    %126 = vmatprep.subr.bf16.mxu0 0
    %127 = vmatpush1.bf16.xpose.msra.mxu0 %v102
    %128 = vmatprep.subr.bf16.mxu0 0
    %129 = vmatpush1.bf16.xpose.msra.mxu0 %v101
    %130 = vmatprep.subr.bf16.mxu0 0
    %131 = vmatpush1.bf16.xpose.msra.mxu0 %v100
    %132 = vmatprep.subr.bf16.mxu0 0
    %133 = vmatpush2.bf16.xpose.msra.mxu0 0
    %134 = vmatprep.subr.bf16.mxu0 0
    %135 = vmatpush2.bf16.xpose.msra.mxu0 0
    %136 = vmatprep.subr.bf16.mxu0 0
    %137 = vmatpush2.bf16.xpose.msra.mxu0 0
    %138 = vmatprep.subr.bf16.mxu0 0
    %139 = vmatpush2.bf16.xpose.msra.mxu0 0
    %140 = vmatprep.subr.bf16.mxu0 0
    %141 = vmatpush2.bf16.xpose.msra.mxu0 0
    %142 = vmatprep.subr.bf16.mxu0 0
    %143 = vmatpush2.bf16.xpose.msra.mxu0 0
    %144 = vmatprep.subr.bf16.mxu0 0
    %145 = vmatpush2.bf16.xpose.msra.mxu0 0
    %146 = vmatprep.subr.bf16.mxu0 0
    %147 = vmatpush2.bf16.xpose.msra.mxu0 0
    %148 = vmatprep.mubr.bf16.mxu0 0
    %149 = vmatmul.mubr.bf16.gmra.mxu0 %v66
    %v150 = vpop.f32.mrf.mxu0
    %v151 = vadd.f32 0.0, %v150
    %v152 = vpop.f32.mrf.mxu0
    %v153 = vpop.f32.mrf.mxu0
    %v154 = vadd.f32 0.0, %v153
    %v155 = vpop.f32.mrf.mxu0
    %156 = vdwg.mxu0
    %v157 = vlaneseq
    %v158 = vand.u32 %v157, 127
    %vm159 = vcmp.lt.s32.totalorder %v158, 64
    %v160 = vsel %vm159, %v151, -1e+30
    %v161 = vsel %vm159, %v154, -1e+30
    %162 = vmax.xlane.f32.xlu0 %v160
    %v163 = vpop.xlane.xlu0 %162
    %164 = vmax.xlane.f32.xlu0 %v161
    %v165 = vpop.xlane.xlu0 %164
    %v166 = vsub.f32 %v160, %v163
    %v167 = vsub.f32 %v161, %v165
    %v168 = vmul.f32 %v166, 1.442695
    %v169 = vpow.pop %v168
    %v170 = vmul.f32 %v167, 1.442695
    %v171 = vpow.pop %v170
    %172 = vadd.xlane.f32.xlu0 %v169
    %v173 = vpop.xlane.xlu0 %172
    %174 = vadd.xlane.f32.xlu0 %v171
    %v175 = vpop.xlane.xlu0 %174
    %v176 = vrcp.pop %v173
    %v177 = vrcp.pop %v175
    %v178 = vmul.f32 %v169, %v176
    %v179 = vmul.f32 %v171, %v177
    %v180 = vsub.f32 %v178, 0.0025
    %v181 = vsub.f32 %v179, 0.0025
    %v182 = vmax.f32 %v180, 0.0
    %v183 = vmax.f32 %v181, 0.0
    %v184 = vmul.f32 %v182, %v178
    %v185 = vmul.f32 %v183, %v179
    %v186 = vand.u32 2147483647, %v180
    %v187 = vand.u32 2147483647, %v181
    %v188 = vadd.f32 %v186, 1e-12
    %v189 = vadd.f32 %v187, 1e-12
    %v190 = vrcp.pop %v188
    %v191 = vrcp.pop %v189
    %v192 = vmul.f32 %v184, %v190
    %v193 = vmul.f32 %v185, %v191
    %v194 = vand.u32 2147483647, %v192
    %v195 = vand.u32 2147483647, %v193
    %196 = vadd.xlane.f32.xlu0 %v194
    %v197 = vpop.xlane.xlu0 %196
    %198 = vadd.xlane.f32.xlu0 %v195
    %v199 = vpop.xlane.xlu0 %198
    %v200 = vmax.f32 %v197, 1e-12
    %v201 = vmax.f32 %v199, 1e-12
    %v202 = vrcp.pop %v200
    %v203 = vrcp.pop %v201
    %v204 = vmul.f32 %v192, %v202
    %v205 = vmul.f32 %v193, %v203
    %v206 = vpack.c.bf16 %v205, %v204
    %207 = vmatprep.subr.bf16.mxu0 0
    %208 = vmatpush1.bf16.msra.mxu0 %v107
    %209 = vmatprep.subr.bf16.mxu0 0
    %210 = vmatpush1.bf16.msra.mxu0 %v106
    %211 = vmatprep.subr.bf16.mxu0 0
    %212 = vmatpush1.bf16.msra.mxu0 %v105
    %213 = vmatprep.subr.bf16.mxu0 0
    %214 = vmatpush1.bf16.msra.mxu0 %v104
    %215 = vmatprep.subr.bf16.mxu0 0
    %216 = vmatpush1.bf16.msra.mxu0 %v103
    %217 = vmatprep.subr.bf16.mxu0 0
    %218 = vmatpush1.bf16.msra.mxu0 %v102
    %219 = vmatprep.subr.bf16.mxu0 0
    %220 = vmatpush1.bf16.msra.mxu0 %v101
    %221 = vmatprep.subr.bf16.mxu0 0
    %222 = vmatpush1.bf16.msra.mxu0 %v100
    %223 = vmatprep.subr.bf16.mxu0 0
    %224 = vmatpush2.bf16.msra.mxu0 0
    %225 = vmatprep.subr.bf16.mxu0 0
    %226 = vmatpush2.bf16.msra.mxu0 0
    %227 = vmatprep.subr.bf16.mxu0 0
    %228 = vmatpush2.bf16.msra.mxu0 0
    %229 = vmatprep.subr.bf16.mxu0 0
    %230 = vmatpush2.bf16.msra.mxu0 0
    %231 = vmatprep.subr.bf16.mxu0 0
    %232 = vmatpush2.bf16.msra.mxu0 0
    %233 = vmatprep.subr.bf16.mxu0 0
    %234 = vmatpush2.bf16.msra.mxu0 0
    %235 = vmatprep.subr.bf16.mxu0 0
    %236 = vmatpush2.bf16.msra.mxu0 0
    %237 = vmatprep.subr.bf16.mxu0 0
    %238 = vmatpush2.bf16.msra.mxu0 0
    %239 = vmatprep.mubr.bf16.mxu0 0
    %240 = vmatmul.mubr.bf16.gmra.mxu0 %v206
    %v241 = vpop.f32.mrf.mxu0
    %v242 = vadd.f32 0.0, %v241
    %v243 = vpop.f32.mrf.mxu0
    %v244 = vpop.f32.mrf.mxu0
    %v245 = vadd.f32 0.0, %v244
    %v246 = vpop.f32.mrf.mxu0
    %247 = vdwg.mxu0
    %248 = vst [vmem:[#allocation7] sm:$0xff] %v242
    %249 = vst [vmem:[#allocation7 + $0x8] sm:$0xff] %v245
    %250 = vst [vmem:[#allocation8] sm:$0xff] %v204
    %251 = vst [vmem:[#allocation8 + $0x8] sm:$0xff] %v205
    // Predicated region
    $region18: #{tpu_custom_call.1} parent=1 // pred_check
      _
    $region19: #{tpu_custom_call.1} parent=1 // pred_check_branch
      %253 = sbr.rel (0) target = $region21
    $region20: #{tpu_custom_call.1} parent=1 // pred_region
      %s255 = ssub.s32 256, 256
      %256 = vsyncadd [#allocation4], %s255
      %s257 = sshll.u32 [#allocation7], 4
      %s258 = int_to_ptr.vmem [resolvable:$true] %s257
      %263 = dma.vmem_to_hbm [thread:$0]  %s258, 256, %s2, [#allocation4], 128, 128, 8
    $region21: #{tpu_custom_call.1} parent=1 // pred_fallthru
      _
    // Predicated region
    $region22: #{tpu_custom_call.1} parent=1 // pred_check
      _
    $region23: #{tpu_custom_call.1} parent=1 // pred_check_branch
      %265 = sbr.rel (0) target = $region25
    $region24: #{tpu_custom_call.1} parent=1 // pred_region
      %s267 = ssub.s32 256, 256
      %268 = vsyncadd [#allocation9], %s267
      %s269 = sshll.u32 [#allocation8], 4
      %s270 = int_to_ptr.vmem [resolvable:$true] %s269
      %275 = dma.vmem_to_hbm [thread:$0]  %s270, 256, %s3, [#allocation9], 128, 128, 8
    $region25: #{tpu_custom_call.1} parent=1 // pred_fallthru
      _
    // Predicated region
    $region26: #{tpu_custom_call.1} parent=1 // pred_check
      _
    $region27: #{tpu_custom_call.1} parent=1 // pred_check_branch
      %277 = sbr.rel (0) target = $region29
    $region28: #{tpu_custom_call.1} parent=1 // pred_region
      %278 = dma.done [#allocation4], 256
    $region29: #{tpu_custom_call.1} parent=1 // pred_fallthru
      _
    // Predicated region
    $region30: #{tpu_custom_call.1} parent=1 // pred_check
      _
    $region31: #{tpu_custom_call.1} parent=1 // pred_check_branch
      %280 = sbr.rel (0) target = $region33
    $region32: #{tpu_custom_call.1} parent=1 // pred_region
      %281 = dma.done [#allocation9], 256
    $region33: #{tpu_custom_call.1} parent=1 // pred_fallthru
      _
    %282 = vsyncpa [#allocation3], 1
    %283 = vsyncpa [#allocation6], 1
    %284 = vsyncpa [#allocation4], 1
    %285 = vsyncpa [#allocation9], 1

</llo_original>
